<compile_context>
chip_gen: v7x
topology: tpu7x:2x2x1
jax: 0.10.0
libtpu: 0.0.40
codegen_flags: <defaults>
</compile_context>

<pallas_src>
import functools

import jax
import jax.numpy as jnp
from jax.experimental import pallas as pl
from jax.experimental.pallas import tpu as pltpu

HIGHEST = jax.lax.Precision.HIGHEST   # host-side folding / reference only


# ---------------------------------------------------------------------------
# Fused st_gcn kernel.  One grid step == one sample, channels-first layout,
# lanes = flattened (t, v).  Everything between the matmuls stays in VMEM.
# ---------------------------------------------------------------------------
def _st_gcn_fused_kernel(xA_ref, x_ref, wg_ref, wt_ref, wr_ref, badd_ref,
                         cadd_ref, o_ref, *, Kt, V, TV):
    pad = (Kt - 1) // 2

    # (1) graph conv: channel contraction (adjacency A was already contracted on
    #     the input side), folded gcn-bias + BN1 affine, ReLU.  The input is
    #     zero-padded by `pad` frames on each side of the time axis; zero those
    #     frames of h explicitly (BN shift / bias would otherwise leak into them).
    g = jnp.dot(wg_ref[...], xA_ref[0], preferred_element_type=jnp.float32)
    h = jnp.maximum(g + badd_ref[...], 0.0)              # (Cout, (T + 2*pad) * V)
    if pad > 0:
        lane = jax.lax.broadcasted_iota(jnp.int32, h.shape, 1)
        h = jnp.where((lane >= pad * V) & (lane < pad * V + TV), h, 0.0)

    # (2) temporal (Kt,1) conv: the Kt taps are static lane windows of the
    #     time-padded h; stack them along sublanes so the whole temporal conv
    #     collapses into ONE deep matmul (feedback: fewer MXU push/drain runs).
    taps = [h[:, kt * V: kt * V + TV] for kt in range(Kt)]
    hstk = jnp.concatenate(taps, axis=0).astype(jnp.bfloat16)   # (Kt*Cout, T*V)
    conv = jnp.dot(wt_ref[...], hstk, preferred_element_type=jnp.float32)

    # (3) residual branch: 1x1 conv (its BN scale folded into wr).
    res = jnp.dot(wr_ref[...], x_ref[0], preferred_element_type=jnp.float32)

    # (4) merged additive constants (conv bias*s2 + t2 + res bias*sr + tr), ReLU.
    o_ref[0] = jnp.maximum(conv + res + cadd_ref[...], 0.0)


def st_gcn_fused(xA_p, x_cf, Wg2, WtF, WrT, badd_p, cadd, *, Kt, V, TV):
    N, KCin, TVp = xA_p.shape
    Cin = x_cf.shape[1]
    Cout = Wg2.shape[0]
    kernel = functools.partial(_st_gcn_fused_kernel, Kt=Kt, V=V, TV=TV)
    return pl.pallas_call(
        kernel,
        out_shape=jax.ShapeDtypeStruct((N, Cout, TV), jnp.float32),
        grid=(N,),
        in_specs=[
            pl.BlockSpec((1, KCin, TVp), lambda n: (n, 0, 0)),   # A-contracted x (per sample)
            pl.BlockSpec((1, Cin, TV), lambda n: (n, 0, 0)),     # raw x (per sample, residual)
            pl.BlockSpec((Cout, KCin), lambda n: (0, 0)),        # gcn weight (constant)
            pl.BlockSpec((Cout, Kt * Cout), lambda n: (0, 0)),   # temporal weight (constant)
            pl.BlockSpec((Cout, Cin), lambda n: (0, 0)),         # residual weight (constant)
            pl.BlockSpec((Cout, TVp), lambda n: (0, 0)),         # gcn bias + BN1 (constant)
            pl.BlockSpec((Cout, 1), lambda n: (0, 0)),           # merged add constants
        ],
        out_specs=pl.BlockSpec((1, Cout, TV), lambda n: (n, 0, 0)),
        compiler_params=pltpu.CompilerParams(
            dimension_semantics=("parallel",),
            vmem_limit_bytes=32 * 1024 * 1024,
        ),
    )(xA_p, x_cf, Wg2, WtF, WrT, badd_p, cadd)


# ---------------------------------------------------------------------------
# st_gcn forward: host-side weight folding + input-side A contraction + kernel.
# ---------------------------------------------------------------------------
def st_gcn_forward(x, A, p):
    N, Cin, T, V = x.shape
    Kk = A.shape[0]
    Cout = p["Wr"].shape[1]
    Kt = p["Wt"].shape[0]
    assert Kt % 2 == 1
    pad = (Kt - 1) // 2
    TV = T * V

    s1 = p["s1"].reshape(Cout); t1 = p["t1"].reshape(Cout)
    s2 = p["s2"].reshape(Cout); t2 = p["t2"].reshape(Cout)
    sr = p["sr"].reshape(Cout); tr = p["tr"].reshape(Cout)
    Wg3 = p["Wg"].reshape(Cin, Kk, Cout)
    bg3 = p["bg"].reshape(Kk, Cout)

    # ---- tiny host-side parameter folding (exact linear-algebra refactoring) ----
    # gcn 1x1 conv weight -> (Cout, K*Cin) with BN1 scale folded, bf16 for the MXU.
    Wg2 = (jnp.transpose(Wg3, (2, 1, 0)).reshape(Cout, Kk * Cin)
           * s1[:, None]).astype(jnp.bfloat16)
    # temporal (Kt,1) conv weight -> (Cout, Kt*Cout) with BN2 scale folded.
    WtF = (jnp.transpose(p["Wt"], (2, 0, 1)).reshape(Cout, Kt * Cout)
           * s2[:, None]).astype(jnp.bfloat16)
    # residual 1x1 conv weight -> (Cout, Cin) with residual BN scale folded.
    WrT = (jnp.transpose(p["Wr"]) * sr[:, None]).astype(jnp.bfloat16)
    # gcn bias pushed through the A contraction, BN1 affine folded, tiled over t
    # (including the `pad` zero frames; those lanes are masked inside the kernel).
    Bg = jnp.einsum("kc,kw->cw", bg3, jnp.sum(A, axis=1), precision=HIGHEST)  # (Cout, V)
    badd_p = jnp.tile(Bg * s1[:, None] + t1[:, None], (1, T + 2 * pad))       # (Cout, TVp)
    # temporal conv bias / BN2 shift / residual bias / residual BN shift merged.
    cadd = (p["bt"].reshape(Cout) * s2 + t2
            + p["br"].reshape(Cout) * sr + tr).reshape(Cout, 1)

    # ---- input-side graph contraction with A (K*Cin channels, time-zero-padded) ----
    # Doing this as one XLA einsum keeps the kernel free of in-kernel lane relayouts
    # between the v-contraction and the (t,v)-flattened matmuls, and avoids ever
    # materializing the V-inflated (Cin*V, Cout*V) folded weight.
    xA = jnp.einsum("nctv,kvw->nkctw", x, A, precision=HIGHEST)      # (N, K, Cin, T, V)
    xA = jnp.pad(xA, ((0, 0), (0, 0), (0, 0), (pad, pad), (0, 0)))   # "same" time pad
    xA_p = xA.reshape(N, Kk * Cin, (T + 2 * pad) * V).astype(jnp.bfloat16)
    x_cf = x.reshape(N, Cin, TV).astype(jnp.bfloat16)                # free reshape

    out = st_gcn_fused(xA_p, x_cf, Wg2, WtF, WrT, badd_p, cadd, Kt=Kt, V=V, TV=TV)
    return out.reshape(N, Cout, T, V), A                             # free reshape


# ---------------------------------------------------------------------------
# deterministic parameter init (shapes follow the nn.Module __init__)
# ---------------------------------------------------------------------------
def init_params(key, Cin, Cout, Kk, Kt):
    ks = jax.random.split(key, 9)
    eps = 1e-5

    def bn(k):
        k1, k2, k3, k4 = jax.random.split(k, 4)
        gamma = 1.0 + 0.1 * jax.random.normal(k1, (Cout,), jnp.float32)
        beta = 0.1 * jax.random.normal(k2, (Cout,), jnp.float32)
        mean = 0.1 * jax.random.normal(k3, (Cout,), jnp.float32)
        var = 1.0 + 0.2 * jax.random.uniform(k4, (Cout,), jnp.float32)
        s = gamma / jnp.sqrt(var + eps)
        t = beta - mean * s
        return s.reshape(1, Cout), t.reshape(1, Cout)

    def nrm(k, shape, scale):
        return scale * jax.random.normal(k, shape, jnp.float32)

    s1, t1 = bn(ks[2])
    s2, t2 = bn(ks[5])
    sr, tr = bn(ks[8])
    return dict(
        Wg=nrm(ks[0], (Cin, Kk * Cout), 0.2),      # gcn 1x1 conv weight (Cin, K*Cout)
        bg=nrm(ks[1], (1, Kk * Cout), 0.1),
        s1=s1, t1=t1,                              # tcn BN1 (folded affine)
        Wt=nrm(ks[3], (Kt, Cout, Cout), 0.1),      # tcn (Kt,1) conv: Wt[kt, c_in, c_out]
        bt=nrm(ks[4], (1, Cout), 0.1),
        s2=s2, t2=t2,                              # tcn BN2
        Wr=nrm(ks[6], (Cin, Cout), 0.2),           # residual 1x1 conv
        br=nrm(ks[7], (1, Cout), 0.1),
        sr=sr, tr=tr,                              # residual BN
    )


# pure-JAX reference mirroring the PyTorch forward (ground truth for self-check)
def reference(x, A, p):
    N, Cin, T, V = x.shape
    Kk = A.shape[0]
    Cout = p["bt"].shape[-1]
    Kt = p["Wt"].shape[0]
    pad = (Kt - 1) // 2

    y = jnp.einsum("nctv,cd->ndtv", x, p["Wg"], precision=HIGHEST)
    y = y + p["bg"].reshape(1, Kk * Cout, 1, 1)
    y = y.reshape(N, Kk, Cout, T, V)
    g = jnp.einsum("nkctv,kvw->nctw", y, A, precision=HIGHEST)

    h = jnp.maximum(g * p["s1"].reshape(1, Cout, 1, 1)
                    + p["t1"].reshape(1, Cout, 1, 1), 0.0)
    h_pad = jnp.pad(h, ((0, 0), (0, 0), (pad, pad), (0, 0)))
    conv = sum(jnp.einsum("nctv,cd->ndtv", h_pad[:, :, kt:kt + T, :], p["Wt"][kt],
                          precision=HIGHEST) for kt in range(Kt))
    conv = conv + p["bt"].reshape(1, Cout, 1, 1)
    tcn = conv * p["s2"].reshape(1, Cout, 1, 1) + p["t2"].reshape(1, Cout, 1, 1)

    r = jnp.einsum("nctv,cd->ndtv", x, p["Wr"], precision=HIGHEST)
    r = r + p["br"].reshape(1, Cout, 1, 1)
    r = r * p["sr"].reshape(1, Cout, 1, 1) + p["tr"].reshape(1, Cout, 1, 1)

    return jnp.maximum(tcn + r, 0.0), A


if __name__ == "__main__":
    N, Cin, Cout, T, V = 2, 4, 32, 16, 16
    Kk, Kt = 3, 3                                   # kernel_size = (Kt, Kk)

    key = jax.random.PRNGKey(0)
    kx, ka, kp = jax.random.split(key, 3)
    x = jax.random.normal(kx, (N, Cin, T, V), jnp.float32)
    A = 0.3 * jax.random.normal(ka, (Kk, V, V), jnp.float32)
    params = init_params(kp, Cin, Cout, Kk, Kt)

    out, A_out = jax.jit(st_gcn_forward)(x, A, params)
    out = jax.block_until_ready(out)

    ref, _ = reference(x, A, params)
    if out.shape != (N, Cout, T, V):
        raise SystemExit("bad output shape %s" % (out.shape,))
    # bf16 operands in the kernel vs. f32 HIGHEST reference
    if not bool(jnp.allclose(out, ref, atol=3e-2, rtol=3e-2)):
        raise SystemExit("mismatch: max abs err = %g"
                         % float(jnp.max(jnp.abs(out - ref))))
    print("KERNEL_OK")
</pallas_src>

<mosaic_0001>
module attributes {stable_mosaic.version = 11 : i64} {
  func.func @_st_gcn_fused_kernel(%arg0: i32, %arg1: memref<1x12x288xbf16, #tpu.memory_space<vmem>>, %arg2: memref<1x4x256xbf16, #tpu.memory_space<vmem>>, %arg3: memref<32x12xbf16, #tpu.memory_space<vmem>>, %arg4: memref<32x96xbf16, #tpu.memory_space<vmem>>, %arg5: memref<32x4xbf16, #tpu.memory_space<vmem>>, %arg6: memref<32x288xf32, #tpu.memory_space<vmem>>, %arg7: memref<32x1xf32, #tpu.memory_space<vmem>>, %arg8: memref<1x32x256xf32, #tpu.memory_space<vmem>>) attributes {dimension_semantics = [#tpu.dimension_semantics<parallel>], iteration_bounds = array<i64: 2>, scalar_prefetch = 0 : i64, scratch_operands = 0 : i64, tpu.core_type = #tpu.core_type<tc>, window_params = [{transform_indices = @transform_0, window_bounds = array<i64: 1, 12, 288>}, {transform_indices = @transform_1, window_bounds = array<i64: 1, 4, 256>}, {pipeline_mode = #tpu.pipeline_mode<synchronous>, transform_indices = @transform_2, window_bounds = array<i64: 32, 12>}, {pipeline_mode = #tpu.pipeline_mode<synchronous>, transform_indices = @transform_3, window_bounds = array<i64: 32, 96>}, {pipeline_mode = #tpu.pipeline_mode<synchronous>, transform_indices = @transform_4, window_bounds = array<i64: 32, 4>}, {pipeline_mode = #tpu.pipeline_mode<synchronous>, transform_indices = @transform_5, window_bounds = array<i64: 32, 288>}, {pipeline_mode = #tpu.pipeline_mode<synchronous>, transform_indices = @transform_6, window_bounds = array<i64: 32, 1>}, {transform_indices = @transform_7, window_bounds = array<i64: 1, 32, 256>}]} {
    %c0 = arith.constant 0 : index
    %c0_0 = arith.constant 0 : index
    %0 = vector.load %arg3[%c0, %c0_0] : memref<32x12xbf16, #tpu.memory_space<vmem>>, vector<32x12xbf16>
    %c0_1 = arith.constant 0 : index
    %c0_2 = arith.constant 0 : index
    %c0_3 = arith.constant 0 : index
    %1 = vector.load %arg1[%c0_1, %c0_2, %c0_3] : memref<1x12x288xbf16, #tpu.memory_space<vmem>>, vector<1x12x288xbf16>
    %2 = vector.shape_cast %1 : vector<1x12x288xbf16> to vector<12x288xbf16>
    %cst = arith.constant dense<0.000000e+00> : vector<32x288xf32>
    %3 = tpu.matmul %0, %2, %cst {dimension_numbers = #tpu.dot_dimension_numbers<[1], [0], [0], [1], [0, 0, 1, 1], [], []>} : vector<32x12xbf16>, vector<12x288xbf16>, vector<32x288xf32> -> vector<32x288xf32>
    %c0_4 = arith.constant 0 : index
    %c0_5 = arith.constant 0 : index
    %4 = vector.load %arg6[%c0_4, %c0_5] : memref<32x288xf32, #tpu.memory_space<vmem>>, vector<32x288xf32>
    %5 = arith.addf %3, %4 : vector<32x288xf32>
    %cst_6 = arith.constant 0.000000e+00 : f32
    %6 = vector.broadcast %cst_6 : f32 to vector<32x288xf32>
    %7 = arith.maximumf %5, %6 : vector<32x288xf32>
    %8 = tpu.iota {dimensions = array<i32: 1>} : vector<32x288xi32>
    %c16_i32 = arith.constant 16 : i32
    %9 = vector.broadcast %c16_i32 : i32 to vector<32x288xi32>
    %10 = arith.cmpi sge, %8, %9 : vector<32x288xi32>
    %c272_i32 = arith.constant 272 : i32
    %11 = vector.broadcast %c272_i32 : i32 to vector<32x288xi32>
    %12 = arith.cmpi slt, %8, %11 : vector<32x288xi32>
    %13 = arith.andi %10, %12 : vector<32x288xi1>
    %cst_7 = arith.constant 0.000000e+00 : f32
    %14 = vector.broadcast %cst_7 : f32 to vector<32x288xf32>
    %15 = arith.select %13, %7, %14 : vector<32x288xi1>, vector<32x288xf32>
    %16 = vector.extract_strided_slice %15 {offsets = [0, 0], sizes = [32, 256], strides = [1, 1]} : vector<32x288xf32> to vector<32x256xf32>
    %17 = vector.extract_strided_slice %15 {offsets = [0, 16], sizes = [32, 256], strides = [1, 1]} : vector<32x288xf32> to vector<32x256xf32>
    %18 = vector.extract_strided_slice %15 {offsets = [0, 32], sizes = [32, 256], strides = [1, 1]} : vector<32x288xf32> to vector<32x256xf32>
    %19 = tpu.concatenate %16, %17, %18 in 0 : vector<32x256xf32>, vector<32x256xf32>, vector<32x256xf32> -> vector<96x256xf32>
    %20 = arith.truncf %19 : vector<96x256xf32> to vector<96x256xbf16>
    %c0_8 = arith.constant 0 : index
    %c0_9 = arith.constant 0 : index
    %21 = vector.load %arg4[%c0_8, %c0_9] : memref<32x96xbf16, #tpu.memory_space<vmem>>, vector<32x96xbf16>
    %cst_10 = arith.constant dense<0.000000e+00> : vector<32x256xf32>
    %22 = tpu.matmul %21, %20, %cst_10 {dimension_numbers = #tpu.dot_dimension_numbers<[1], [0], [0], [1], [0, 0, 1, 1], [], []>} : vector<32x96xbf16>, vector<96x256xbf16>, vector<32x256xf32> -> vector<32x256xf32>
    %c0_11 = arith.constant 0 : index
    %c0_12 = arith.constant 0 : index
    %23 = vector.load %arg5[%c0_11, %c0_12] : memref<32x4xbf16, #tpu.memory_space<vmem>>, vector<32x4xbf16>
    %c0_13 = arith.constant 0 : index
    %c0_14 = arith.constant 0 : index
    %c0_15 = arith.constant 0 : index
    %24 = vector.load %arg2[%c0_13, %c0_14, %c0_15] : memref<1x4x256xbf16, #tpu.memory_space<vmem>>, vector<1x4x256xbf16>
    %25 = vector.shape_cast %24 : vector<1x4x256xbf16> to vector<4x256xbf16>
    %cst_16 = arith.constant dense<0.000000e+00> : vector<32x256xf32>
    %26 = tpu.matmul %23, %25, %cst_16 {dimension_numbers = #tpu.dot_dimension_numbers<[1], [0], [0], [1], [0, 0, 1, 1], [], []>} : vector<32x4xbf16>, vector<4x256xbf16>, vector<32x256xf32> -> vector<32x256xf32>
    %27 = arith.addf %22, %26 : vector<32x256xf32>
    %c0_17 = arith.constant 0 : index
    %c0_18 = arith.constant 0 : index
    %28 = vector.load %arg7[%c0_17, %c0_18] : memref<32x1xf32, #tpu.memory_space<vmem>>, vector<32x1xf32>
    %29 = vector.broadcast %28 : vector<32x1xf32> to vector<32x256xf32>
    %30 = arith.addf %27, %29 : vector<32x256xf32>
    %cst_19 = arith.constant 0.000000e+00 : f32
    %31 = vector.broadcast %cst_19 : f32 to vector<32x256xf32>
    %32 = arith.maximumf %30, %31 : vector<32x256xf32>
    %c0_20 = arith.constant 0 : index
    %c0_21 = arith.constant 0 : index
    %c0_22 = arith.constant 0 : index
    %33 = vector.load %arg8[%c0_20, %c0_21, %c0_22] : memref<1x32x256xf32, #tpu.memory_space<vmem>>, vector<1x32x256xf32>
    %34 = vector.shape_cast %33 : vector<1x32x256xf32> to vector<32x256xf32>
    %35 = vector.shape_cast %32 : vector<32x256xf32> to vector<1x32x256xf32>
    tpu.vector_store %arg8[%c0_20, %c0_21, %c0_22], %35 {strides = array<i32>} : memref<1x32x256xf32, #tpu.memory_space<vmem>>, vector<1x32x256xf32>,
    return
  }
  func.func @transform_0(%arg0: i32) -> (i32, i32, i32) {
    %c0_i32 = arith.constant 0 : i32
    %c0_i32_0 = arith.constant 0 : i32
    %c0_i32_1 = arith.constant 0 : i32
    return %arg0, %c0_i32, %c0_i32_0 : i32, i32, i32
  }
  func.func @transform_1(%arg0: i32) -> (i32, i32, i32) {
    %c0_i32 = arith.constant 0 : i32
    %c0_i32_0 = arith.constant 0 : i32
    %c0_i32_1 = arith.constant 0 : i32
    return %arg0, %c0_i32, %c0_i32_0 : i32, i32, i32
  }
  func.func @transform_2(%arg0: i32) -> (i32, i32) {
    %c0_i32 = arith.constant 0 : i32
    %c0_i32_0 = arith.constant 0 : i32
    %c0_i32_1 = arith.constant 0 : i32
    return %c0_i32, %c0_i32_0 : i32, i32
  }
  func.func @transform_3(%arg0: i32) -> (i32, i32) {
    %c0_i32 = arith.constant 0 : i32
    %c0_i32_0 = arith.constant 0 : i32
    %c0_i32_1 = arith.constant 0 : i32
    return %c0_i32, %c0_i32_0 : i32, i32
  }
  func.func @transform_4(%arg0: i32) -> (i32, i32) {
    %c0_i32 = arith.constant 0 : i32
    %c0_i32_0 = arith.constant 0 : i32
    %c0_i32_1 = arith.constant 0 : i32
    return %c0_i32, %c0_i32_0 : i32, i32
  }
  func.func @transform_5(%arg0: i32) -> (i32, i32) {
    %c0_i32 = arith.constant 0 : i32
    %c0_i32_0 = arith.constant 0 : i32
    %c0_i32_1 = arith.constant 0 : i32
    return %c0_i32, %c0_i32_0 : i32, i32
  }
  func.func @transform_6(%arg0: i32) -> (i32, i32) {
    %c0_i32 = arith.constant 0 : i32
    %c0_i32_0 = arith.constant 0 : i32
    %c0_i32_1 = arith.constant 0 : i32
    return %c0_i32, %c0_i32_0 : i32, i32
  }
  func.func @transform_7(%arg0: i32) -> (i32, i32, i32) {
    %c0_i32 = arith.constant 0 : i32
    %c0_i32_0 = arith.constant 0 : i32
    %c0_i32_1 = arith.constant 0 : i32
    return %arg0, %c0_i32, %c0_i32_0 : i32, i32, i32
  }
}

</mosaic_0001>

<llo_original>
// kernel: st_gcn_forward.1
$region0: #{st_gcn_forward.1}
  #allocation0 [shape = 'u32[]', space=smem, size = 0x4, offset = 0x4, fixed_abs, tag = 'smem constant byte address 0x4 - core index']
  #allocation1 [shape = 'u32[144,128]{1,0:T(1,128)}', space=vmem, size = 0x12000, scoped, tag = 'internal scratch']
  %s0 = inlined_call_operand.vmem [shape: bf16[2,12,288], index: 0, kind: input, shape index: {}]
  %s1 = inlined_call_operand.vmem [shape: bf16[2,4,256], index: 1, kind: input, shape index: {}]
  %s2 = inlined_call_operand.vmem [shape: bf16[32,12], index: 2, kind: input, shape index: {}]
  %s3 = inlined_call_operand.vmem [shape: bf16[32,96], index: 3, kind: input, shape index: {}]
  %s4 = inlined_call_operand.vmem [shape: bf16[32,4], index: 4, kind: input, shape index: {}]
  %s5 = inlined_call_operand.vmem [shape: f32[32,288], index: 5, kind: input, shape index: {}]
  %s6 = inlined_call_operand.vmem [shape: f32[32,1], index: 6, kind: input, shape index: {}]
  %s7 = inlined_call_operand.vmem [shape: f32[2,32,256], index: 7, kind: output, shape index: {}]
  %s8 = sld [smem:[#allocation0]]
  $region61: #{st_gcn_forward.1} parent=0
    _
  %s10 = ssub.s32 1, %s8
  %s11 = scalar_select 0, %s10, %s8
  loop: start=0, step=1, limit=4
  $region2: #{st_gcn_forward.1} parent=0 // loop_pre_header
    _
  $region3: #{st_gcn_forward.1} parent=0 // loop_header
    %s13 = sphi 0, %s17
    %p14 = scmp.ge.s32.totalorder %s13, 4
    %s23 = sphi 0, %s25
    %s26 = sphi 0, %s23
    %s27 = sphi 0, %s26
    %s43 = sphi 0, %s27
    %s49 = sphi 0, %s51
    %s52 = sphi 0, %s49
    %s53 = sphi 0, %s52
    %s69 = sphi 0, %s53
    %s73 = sphi 0, %s73
    %s75 = sphi 0, %s73
    %s76 = sphi 0, %s75
    %s90 = sphi 0, %s76
    %s94 = sphi 0, %s94
    %s96 = sphi 0, %s94
    %s97 = sphi 0, %s96
    %s111 = sphi 0, %s97
    %s115 = sphi 0, %s115
    %s117 = sphi 0, %s115
    %s118 = sphi 0, %s117
    %s132 = sphi 0, %s118
    %s136 = sphi 0, %s136
    %s138 = sphi 0, %s136
    %s139 = sphi 0, %s138
    %s153 = sphi 0, %s139
    %s157 = sphi 0, %s157
    %s159 = sphi 0, %s157
    %s160 = sphi 0, %s159
    %s174 = sphi 0, %s160
    %s180 = sphi 0, %s182
    %s183 = sphi 0, %s180
    %s184 = sphi 0, %s183
    %s200 = sphi 0, %s184
  $region4: #{st_gcn_forward.1} parent=0 // loop_header_branch
    %16 = sbr.rel (%p14) target = $region8
  $region5: #{st_gcn_forward.1} parent=0 // loop_body
    %s18 = ssub.s32 %s13, 1
    %s19 = ssub.s32 %s13, 2
    %s20 = sadd.s32 %s13, 1
    %s21 = ssub.s32 %s13, %s20
    %p22 = scmp.eq.s32.totalorder %s21, 0
    %s24 = sadd.s32 %s23, 1
    %s25 = scalar_select %p22, %s23, %s24
    %p28 = pneg %p22
    %p29 = scmp.eq.s32.totalorder %s13, 1
    %p30 = por %p28, %p29
    %p31 = scmp.ne.s32.totalorder %s23, %s26
    %p32 = scmp.eq.s32.totalorder %s13, 0
    %p33 = por %p31, %p32
    %p34 = scmp.ne.s32.totalorder %s23, %s26
    %p35 = scmp.eq.s32.totalorder %s18, 1
    %p36 = por %p34, %p35
    %p37 = scmp.ne.s32.totalorder %s26, %s27
    %p38 = scmp.eq.s32.totalorder %s18, 0
    %p39 = por %p37, %p38
    %p40 = scmp.ne.s32.totalorder %s26, %s27
    %p41 = scmp.eq.s32.totalorder %s19, 1
    %p42 = por %p40, %p41
    %p44 = scmp.ne.s32.totalorder %s27, %s43
    %p45 = scmp.eq.s32.totalorder %s19, 0
    %p46 = por %p44, %p45
    %s47 = ssub.s32 %s13, %s20
    %p48 = scmp.eq.s32.totalorder %s47, 0
    %s50 = sadd.s32 %s49, 1
    %s51 = scalar_select %p48, %s49, %s50
    %p54 = pneg %p48
    %p55 = scmp.eq.s32.totalorder %s13, 1
    %p56 = por %p54, %p55
    %p57 = scmp.ne.s32.totalorder %s49, %s52
    %p58 = scmp.eq.s32.totalorder %s13, 0
    %p59 = por %p57, %p58
    %p60 = scmp.ne.s32.totalorder %s49, %s52
    %p61 = scmp.eq.s32.totalorder %s18, 1
    %p62 = por %p60, %p61
    %p63 = scmp.ne.s32.totalorder %s52, %s53
    %p64 = scmp.eq.s32.totalorder %s18, 0
    %p65 = por %p63, %p64
    %p66 = scmp.ne.s32.totalorder %s52, %s53
    %p67 = scmp.eq.s32.totalorder %s19, 1
    %p68 = por %p66, %p67
    %p70 = scmp.ne.s32.totalorder %s53, %s69
    %p71 = scmp.eq.s32.totalorder %s19, 0
    %p72 = por %p70, %p71
    %s74 = sadd.s32 %s73, 1
    %p77 = scmp.eq.s32.totalorder %s13, 1
    %p78 = scmp.ne.s32.totalorder %s73, %s75
    %p79 = scmp.eq.s32.totalorder %s13, 0
    %p80 = por %p78, %p79
    %p81 = scmp.ne.s32.totalorder %s73, %s75
    %p82 = scmp.eq.s32.totalorder %s18, 1
    %p83 = por %p81, %p82
    %p84 = scmp.ne.s32.totalorder %s75, %s76
    %p85 = scmp.eq.s32.totalorder %s18, 0
    %p86 = por %p84, %p85
    %p87 = scmp.ne.s32.totalorder %s75, %s76
    %p88 = scmp.eq.s32.totalorder %s19, 1
    %p89 = por %p87, %p88
    %p91 = scmp.ne.s32.totalorder %s76, %s90
    %p92 = scmp.eq.s32.totalorder %s19, 0
    %p93 = por %p91, %p92
    %s95 = sadd.s32 %s94, 1
    %p98 = scmp.eq.s32.totalorder %s13, 1
    %p99 = scmp.ne.s32.totalorder %s94, %s96
    %p100 = scmp.eq.s32.totalorder %s13, 0
    %p101 = por %p99, %p100
    %p102 = scmp.ne.s32.totalorder %s94, %s96
    %p103 = scmp.eq.s32.totalorder %s18, 1
    %p104 = por %p102, %p103
    %p105 = scmp.ne.s32.totalorder %s96, %s97
    %p106 = scmp.eq.s32.totalorder %s18, 0
    %p107 = por %p105, %p106
    %p108 = scmp.ne.s32.totalorder %s96, %s97
    %p109 = scmp.eq.s32.totalorder %s19, 1
    %p110 = por %p108, %p109
    %p112 = scmp.ne.s32.totalorder %s97, %s111
    %p113 = scmp.eq.s32.totalorder %s19, 0
    %p114 = por %p112, %p113
    %s116 = sadd.s32 %s115, 1
    %p119 = scmp.eq.s32.totalorder %s13, 1
    %p120 = scmp.ne.s32.totalorder %s115, %s117
    %p121 = scmp.eq.s32.totalorder %s13, 0
    %p122 = por %p120, %p121
    %p123 = scmp.ne.s32.totalorder %s115, %s117
    %p124 = scmp.eq.s32.totalorder %s18, 1
    %p125 = por %p123, %p124
    %p126 = scmp.ne.s32.totalorder %s117, %s118
    %p127 = scmp.eq.s32.totalorder %s18, 0
    %p128 = por %p126, %p127
    %p129 = scmp.ne.s32.totalorder %s117, %s118
    %p130 = scmp.eq.s32.totalorder %s19, 1
    %p131 = por %p129, %p130
    %p133 = scmp.ne.s32.totalorder %s118, %s132
    %p134 = scmp.eq.s32.totalorder %s19, 0
    %p135 = por %p133, %p134
    %s137 = sadd.s32 %s136, 1
    %p140 = scmp.eq.s32.totalorder %s13, 1
    %p141 = scmp.ne.s32.totalorder %s136, %s138
    %p142 = scmp.eq.s32.totalorder %s13, 0
    %p143 = por %p141, %p142
    %p144 = scmp.ne.s32.totalorder %s136, %s138
    %p145 = scmp.eq.s32.totalorder %s18, 1
    %p146 = por %p144, %p145
    %p147 = scmp.ne.s32.totalorder %s138, %s139
    %p148 = scmp.eq.s32.totalorder %s18, 0
    %p149 = por %p147, %p148
    %p150 = scmp.ne.s32.totalorder %s138, %s139
    %p151 = scmp.eq.s32.totalorder %s19, 1
    %p152 = por %p150, %p151
    %p154 = scmp.ne.s32.totalorder %s139, %s153
    %p155 = scmp.eq.s32.totalorder %s19, 0
    %p156 = por %p154, %p155
    %s158 = sadd.s32 %s157, 1
    %p161 = scmp.eq.s32.totalorder %s13, 1
    %p162 = scmp.ne.s32.totalorder %s157, %s159
    %p163 = scmp.eq.s32.totalorder %s13, 0
    %p164 = por %p162, %p163
    %p165 = scmp.ne.s32.totalorder %s157, %s159
    %p166 = scmp.eq.s32.totalorder %s18, 1
    %p167 = por %p165, %p166
    %p168 = scmp.ne.s32.totalorder %s159, %s160
    %p169 = scmp.eq.s32.totalorder %s18, 0
    %p170 = por %p168, %p169
    %p171 = scmp.ne.s32.totalorder %s159, %s160
    %p172 = scmp.eq.s32.totalorder %s19, 1
    %p173 = por %p171, %p172
    %p175 = scmp.ne.s32.totalorder %s160, %s174
    %p176 = scmp.eq.s32.totalorder %s19, 0
    %p177 = por %p175, %p176
    %s178 = ssub.s32 %s13, %s20
    %p179 = scmp.eq.s32.totalorder %s178, 0
    %s181 = sadd.s32 %s180, 1
    %s182 = scalar_select %p179, %s180, %s181
    %p185 = pneg %p179
    %p186 = scmp.eq.s32.totalorder %s13, 1
    %p187 = por %p185, %p186
    %p188 = scmp.ne.s32.totalorder %s180, %s183
    %p189 = scmp.eq.s32.totalorder %s13, 0
    %p190 = por %p188, %p189
    %p191 = scmp.ne.s32.totalorder %s180, %s183
    %p192 = scmp.eq.s32.totalorder %s18, 1
    %p193 = por %p191, %p192
    %p194 = scmp.ne.s32.totalorder %s183, %s184
    %p195 = scmp.eq.s32.totalorder %s18, 0
    %p196 = por %p194, %p195
    %p197 = scmp.ne.s32.totalorder %s183, %s184
    %p198 = scmp.eq.s32.totalorder %s19, 1
    %p199 = por %p197, %p198
    %p201 = scmp.ne.s32.totalorder %s184, %s200
    %p202 = scmp.eq.s32.totalorder %s19, 0
    %p203 = por %p201, %p202
    %p204 = scmp.le.s32.totalorder 1, %s13
    %p205 = scmp.lt.s32.totalorder %s13, 3
    %p206 = pnand %p204, %p205
    %p207 = pneg %p206
    // Predicated region
    $region9: #{st_gcn_forward.1} parent=5 // pred_check
      _
    $region10: #{st_gcn_forward.1} parent=5 // pred_check_branch
      %209 = sbr.rel (%p206) target = $region12
    $region11: #{st_gcn_forward.1} parent=5 // pred_region
      %s210 = ssub.s32 %s13, 1
      // Predicated region
      $region13: #{st_gcn_forward.1} parent=11 // pred_check
        %p211 = pneg %p86
      $region14: #{st_gcn_forward.1} parent=11 // pred_check_branch
        %213 = sbr.rel (%p211) target = $region16
      $region15: #{st_gcn_forward.1} parent=11 // pred_region
        _
      $region16: #{st_gcn_forward.1} parent=11 // pred_fallthru
        _
      // Predicated region
      $region17: #{st_gcn_forward.1} parent=11 // pred_check
        %p214 = pneg %p107
      $region18: #{st_gcn_forward.1} parent=11 // pred_check_branch
        %216 = sbr.rel (%p214) target = $region20
      $region19: #{st_gcn_forward.1} parent=11 // pred_region
        _
      $region20: #{st_gcn_forward.1} parent=11 // pred_fallthru
        _
      // Predicated region
      $region21: #{st_gcn_forward.1} parent=11 // pred_check
        %p217 = pneg %p128
      $region22: #{st_gcn_forward.1} parent=11 // pred_check_branch
        %219 = sbr.rel (%p217) target = $region24
      $region23: #{st_gcn_forward.1} parent=11 // pred_region
        _
      $region24: #{st_gcn_forward.1} parent=11 // pred_fallthru
        _
      // Predicated region
      $region25: #{st_gcn_forward.1} parent=11 // pred_check
        %p220 = pneg %p149
      $region26: #{st_gcn_forward.1} parent=11 // pred_check_branch
        %222 = sbr.rel (%p220) target = $region28
      $region27: #{st_gcn_forward.1} parent=11 // pred_region
        _
      $region28: #{st_gcn_forward.1} parent=11 // pred_fallthru
        _
      // Predicated region
      $region29: #{st_gcn_forward.1} parent=11 // pred_check
        %p223 = pneg %p170
      $region30: #{st_gcn_forward.1} parent=11 // pred_check_branch
        %225 = sbr.rel (%p223) target = $region32
      $region31: #{st_gcn_forward.1} parent=11 // pred_region
        _
      $region32: #{st_gcn_forward.1} parent=11 // pred_fallthru
        _
    $region12: #{st_gcn_forward.1} parent=5 // pred_fallthru
      _
    %p226 = scmp.lt.s32.totalorder %s13, 2
    // Predicated region
    $region33: #{st_gcn_forward.1} parent=5 // pred_check
      %p227 = pneg %p226
    $region34: #{st_gcn_forward.1} parent=5 // pred_check_branch
      %229 = sbr.rel (%p227) target = $region36
    $region35: #{st_gcn_forward.1} parent=5 // pred_region
      // Predicated region
      $region37: #{st_gcn_forward.1} parent=35 // pred_check
        %p230 = pneg %p33
      $region38: #{st_gcn_forward.1} parent=35 // pred_check_branch
        %232 = sbr.rel (%p230) target = $region40
      $region39: #{st_gcn_forward.1} parent=35 // pred_region
        %p233 = scmp.lt.s32.totalorder %s13, 1
        %s234 = scalar_select %p233, %s13, 1
        %s235 = smul.addr %s234, 6
        %s236 = smul.addr %s235, 4
        %s237 = scalar_lea.vmem %s0, %s236
      $region40: #{st_gcn_forward.1} parent=35 // pred_fallthru
        _
      // Predicated region
      $region41: #{st_gcn_forward.1} parent=35 // pred_check
        %p238 = pneg %p59
      $region42: #{st_gcn_forward.1} parent=35 // pred_check_branch
        %240 = sbr.rel (%p238) target = $region44
      $region43: #{st_gcn_forward.1} parent=35 // pred_region
        %p241 = scmp.lt.s32.totalorder %s13, 1
        %s242 = scalar_select %p241, %s13, 1
        %s243 = smul.addr %s242, 2
        %s244 = smul.addr %s243, 2
        %s245 = scalar_lea.vmem %s1, %s244
      $region44: #{st_gcn_forward.1} parent=35 // pred_fallthru
        _
    $region36: #{st_gcn_forward.1} parent=5 // pred_fallthru
      _
    %p246 = scmp.le.s32.totalorder 1, %s13
    %p247 = scmp.lt.s32.totalorder %s13, 3
    %p248 = pnand %p246, %p247
    %p249 = pneg %p248
    // Predicated region
    $region45: #{st_gcn_forward.1} parent=5 // pred_check
      _
    $region46: #{st_gcn_forward.1} parent=5 // pred_check_branch
      %251 = sbr.rel (%p248) target = $region48
    $region47: #{st_gcn_forward.1} parent=5 // pred_region
      %s252 = ssub.s32 %s13, 1
      %p253 = scmp.lt.s32.totalorder %s18, 1
      %s254 = scalar_select %p253, %s18, 1
      %s255 = smul.addr %s254, 6
      %s256 = smul.addr %s255, 4
      %s257 = scalar_lea.vmem %s0, %s256
      %p258 = pneg %p39
      %p259 = pneg %p36
      %p260 = scmp.lt.s32.totalorder %s18, 1
      %s261 = scalar_select %p260, %s18, 1
      %s262 = smul.addr %s261, 2
      %s263 = smul.addr %s262, 2
      %s264 = scalar_lea.vmem %s1, %s263
      %p265 = pneg %p65
      %p266 = pneg %p62
      %p267 = pneg %p86
      %p268 = pneg %p83
      %p269 = pneg %p107
      %p270 = pneg %p104
      %p271 = pneg %p128
      %p272 = pneg %p125
      %p273 = pneg %p149
      %p274 = pneg %p146
      %p275 = pneg %p170
      %p276 = pneg %p167
      %p277 = pneg %p196
      %p278 = pneg %p193
      %p279 = scmp.lt.s32.totalorder %s18, 1
      %s280 = scalar_select %p279, %s18, 1
      %s281 = smul.addr %s280, 8
      %s282 = smul.addr %s281, 8
      %s283 = scalar_lea.vmem %s7, %s282
      %p284 = scmp.lt.s32.totalorder %s18, 1
      %s285 = scalar_select %p284, %s18, 1
      %s286 = smul.addr %s285, 6
      %s287 = smul.addr %s286, 4
      %s288 = scalar_lea.vmem %s0, %s287
      %p289 = scmp.lt.s32.totalorder %s18, 1
      %s290 = scalar_select %p289, %s18, 1
      %s291 = smul.addr %s290, 2
      %s292 = smul.addr %s291, 2
      %s293 = scalar_lea.vmem %s1, %s292
      %p294 = scmp.lt.s32.totalorder %s18, 1
      %s295 = scalar_select %p294, %s18, 1
      %s296 = smul.addr %s295, 8
      %s297 = smul.addr %s296, 8
      %s298 = scalar_lea.vmem %s7, %s297
      %v300 = vld [vmem:[%s2] sm:$0xf]
      %v301 = vld [vmem:[%s2 + $0x4] sm:$0xf]
      %v302 = vld [vmem:[%s2 + $0x8] sm:$0xf]
      %v303 = vld [vmem:[%s2 + $0xc] sm:$0xf]
      %v304 = vld [vmem:[%s288] sm:$0xff]
      %v305 = vld [vmem:[%s288 + $0x8] sm:$0xf]
      %v306 = vld [vmem:[%s288 + $0xc] sm:$0x33]
      %v307 = vld [vmem:[%s288 + $0x14] sm:$0x3]
      %v308 = vld [vmem:[%s5] sm:$0xff]
      %v309 = vld [vmem:[%s5 + $0x8] sm:$0xff]
      %v310 = vld [vmem:[%s5 + $0x10] sm:$0xff]
      %v311 = vld [vmem:[%s5 + $0x18] sm:$0xff]
      %v312 = vld [vmem:[%s5 + $0x20] sm:$0xff]
      %v313 = vld [vmem:[%s5 + $0x28] sm:$0xff]
      %v314 = vld [vmem:[%s5 + $0x30] sm:$0xff]
      %v315 = vld [vmem:[%s5 + $0x38] sm:$0xff]
      %v316 = vld [vmem:[%s5 + $0x40] sm:$0xff]
      %v317 = vld [vmem:[%s5 + $0x48] sm:$0xff]
      %v318 = vld [vmem:[%s5 + $0x50] sm:$0xff]
      %v319 = vld [vmem:[%s5 + $0x58] sm:$0xff]
      %v324 = vunpack.c.l.b16 %v300
      %v325 = vunpack.c.l.b16 %v301
      %v326 = vunpack.c.l.b16 %v302
      %v327 = vunpack.c.l.b16 %v303
      %v328 = vpack.c.b16 %v325, %v324
      %v329 = vpack.c.b16 %v327, %v326
      %v334 = vunpack.c.l.b16 %v304
      %v335 = vunpack.c.h.b16 %v304
      %v336 = vunpack.c.l.b16 %v305
      %v337 = vunpack.c.l.b16 %v306
      %v338 = vunpack.c.h.b16 %v306
      %v339 = vunpack.c.l.b16 %v307
      %v340 = vpack.c.b16 %v337, %v334
      %v341 = vpack.c.b16 %v338, %v335
      %v342 = vpack.c.b16 %v339, %v336
      %vm343 = vcmask 97280
      %v345 = vsel %vm343, %v328, 0
      %v348 = vsel %vm343, %v329, 0
      %vm350 = vcmask 1045504
      %v352 = vsel %vm350, %v340, 0
      %v355 = vsel %vm350, %v341, 0
      %v358 = vsel %vm350, %v342, 0
      %360 = vmatprep.subr.bf16.mxu0 %v355
      %361 = vmatpush1.bf16.msra.mxu0 %v352
      %362 = vmatprep.subr.bf16.mxu0 0
      %363 = vmatpush1.bf16.msra.mxu0 0
      %364 = vmatprep.subr.bf16.mxu0 0
      %365 = vmatpush1.bf16.msra.mxu0 0
      %366 = vmatprep.subr.bf16.mxu0 0
      %367 = vmatpush1.bf16.msra.mxu0 0
      %368 = vmatprep.subr.bf16.mxu0 0
      %369 = vmatpush1.bf16.msra.mxu0 0
      %370 = vmatprep.subr.bf16.mxu0 0
      %371 = vmatpush1.bf16.msra.mxu0 0
      %372 = vmatprep.subr.bf16.mxu0 0
      %373 = vmatpush1.bf16.msra.mxu0 0
      %374 = vmatprep.subr.bf16.mxu0 0
      %375 = vmatpush1.bf16.msra.mxu0 0
      %376 = vmatprep.subr.bf16.mxu0 0
      %377 = vmatpush1.bf16.msra.mxu0 0
      %378 = vmatprep.subr.bf16.mxu0 0
      %379 = vmatpush1.bf16.msra.mxu0 0
      %380 = vmatprep.subr.bf16.mxu0 0
      %381 = vmatpush1.bf16.msra.mxu0 0
      %382 = vmatprep.subr.bf16.mxu0 0
      %383 = vmatpush1.bf16.msra.mxu0 0
      %384 = vmatprep.subr.bf16.mxu0 0
      %385 = vmatpush1.bf16.msra.mxu0 0
      %386 = vmatprep.subr.bf16.mxu0 0
      %387 = vmatpush1.bf16.msra.mxu0 0
      %388 = vmatprep.subr.bf16.mxu0 0
      %389 = vmatpush1.bf16.msra.mxu0 0
      %390 = vmatprep.subr.bf16.mxu0 0
      %391 = vmatpush1.bf16.msra.mxu0 0
      %392 = vmatprep.mubr.bf16.mxu0 0
      %393 = vmatmul.mubr.bf16.gmra.mrb[0].mxu0 %v345
      %v394 = vpop.f32.mrb[0].mxu0
      %v395 = vadd.f32 %v308, %v394
      %v396 = vpop.f32.mrb[0].mxu0
      %v397 = vadd.f32 %v309, %v396
      %v398 = vpop.f32.mrb[0].mxu0
      %v399 = vadd.f32 %v311, %v398
      %v400 = vpop.f32.mrb[0].mxu0
      %v401 = vadd.f32 %v312, %v400
      %402 = vmatprep.mubr.bf16.mxu0 0
      %403 = vmatmul.mubr.bf16.gmra.mrb[0].mxu0 %v348
      %v404 = vpop.f32.mrb[0].mxu0
      %v405 = vadd.f32 %v314, %v404
      %v406 = vpop.f32.mrb[0].mxu0
      %v407 = vadd.f32 %v315, %v406
      %v408 = vpop.f32.mrb[0].mxu0
      %v409 = vadd.f32 %v317, %v408
      %v410 = vpop.f32.mrb[0].mxu0
      %v411 = vadd.f32 %v318, %v410
      %412 = vdwg.mxu0
      %413 = vmatprep.subr.bf16.mxu0 0
      %414 = vmatpush1.bf16.msra.mxu0 %v358
      %415 = vmatprep.subr.bf16.mxu0 0
      %416 = vmatpush1.bf16.msra.mxu0 0
      %417 = vmatprep.subr.bf16.mxu0 0
      %418 = vmatpush1.bf16.msra.mxu0 0
      %419 = vmatprep.subr.bf16.mxu0 0
      %420 = vmatpush1.bf16.msra.mxu0 0
      %421 = vmatprep.subr.bf16.mxu0 0
      %422 = vmatpush1.bf16.msra.mxu0 0
      %423 = vmatprep.subr.bf16.mxu0 0
      %424 = vmatpush1.bf16.msra.mxu0 0
      %425 = vmatprep.subr.bf16.mxu0 0
      %426 = vmatpush1.bf16.msra.mxu0 0
      %427 = vmatprep.subr.bf16.mxu0 0
      %428 = vmatpush1.bf16.msra.mxu0 0
      %429 = vmatprep.subr.bf16.mxu0 0
      %430 = vmatpush1.bf16.msra.mxu0 0
      %431 = vmatprep.subr.bf16.mxu0 0
      %432 = vmatpush1.bf16.msra.mxu0 0
      %433 = vmatprep.subr.bf16.mxu0 0
      %434 = vmatpush1.bf16.msra.mxu0 0
      %435 = vmatprep.subr.bf16.mxu0 0
      %436 = vmatpush1.bf16.msra.mxu0 0
      %437 = vmatprep.subr.bf16.mxu0 0
      %438 = vmatpush1.bf16.msra.mxu0 0
      %439 = vmatprep.subr.bf16.mxu0 0
      %440 = vmatpush1.bf16.msra.mxu0 0
      %441 = vmatprep.subr.bf16.mxu0 0
      %442 = vmatpush1.bf16.msra.mxu0 0
      %443 = vmatprep.subr.bf16.mxu0 0
      %444 = vmatpush1.bf16.msra.mxu0 0
      %445 = vmatprep.mubr.bf16.mxu0 0
      %446 = vmatmul.mubr.bf16.gmra.mrb[0].mxu0 %v345
      %v447 = vpop.f32.mrb[0].mxu0
      %v448 = vadd.f32 %v310, %v447
      %v449 = vpop.f32.mrb[0].mxu0
      %v450 = vpop.f32.mrb[0].mxu0
      %v451 = vadd.f32 %v313, %v450
      %v452 = vpop.f32.mrb[0].mxu0
      %453 = vmatprep.mubr.bf16.mxu0 0
      %454 = vmatmul.mubr.bf16.gmra.mrb[0].mxu0 %v348
      %v455 = vpop.f32.mrb[0].mxu0
      %v456 = vadd.f32 %v316, %v455
      %v457 = vpop.f32.mrb[0].mxu0
      %v458 = vpop.f32.mrb[0].mxu0
      %v459 = vadd.f32 %v319, %v458
      %v460 = vpop.f32.mrb[0].mxu0
      %461 = vdwg.mxu0
      %v462 = vmax.f32 %v395, 0.0
      %v463 = vmax.f32 %v397, 0.0
      %v464 = vmax.f32 %v448, 0.0
      %v465 = vmax.f32 %v399, 0.0
      %v466 = vmax.f32 %v401, 0.0
      %v467 = vmax.f32 %v451, 0.0
      %v468 = vmax.f32 %v405, 0.0
      %v469 = vmax.f32 %v407, 0.0
      %v470 = vmax.f32 %v456, 0.0
      %v471 = vmax.f32 %v409, 0.0
      %v472 = vmax.f32 %v411, 0.0
      %v473 = vmax.f32 %v459, 0.0
      %v474 = vlaneseq
      %v475 = vand.u32 %v474, 127
      %v476 = vadd.s32 %v475, 128
      %v477 = vadd.s32 %v475, 256
      %vm478 = vcmp.ge.s32.totalorder %v475, 16
      %vm479 = vcmp.ge.s32.totalorder %v476, 16
      %vm480 = vcmp.ge.s32.totalorder %v477, 16
      %vm481 = vcmp.lt.s32.totalorder %v475, 272
      %vm482 = vcmp.lt.s32.totalorder %v476, 272
      %vm483 = vcmp.lt.s32.totalorder %v477, 272
      %vm484 = vmand %vm478, %vm481
      %vm485 = vmand %vm479, %vm482
      %vm486 = vmand %vm480, %vm483
      %v487 = vsel %vm484, %v462, 0.0
      %v488 = vsel %vm485, %v463, 0.0
      %v489 = vsel %vm486, %v464, 0.0
      %v490 = vsel %vm484, %v465, 0.0
      %v491 = vsel %vm485, %v466, 0.0
      %v492 = vsel %vm486, %v467, 0.0
      %v493 = vsel %vm484, %v468, 0.0
      %v494 = vsel %vm485, %v469, 0.0
      %v495 = vsel %vm486, %v470, 0.0
      %v496 = vsel %vm484, %v471, 0.0
      %v497 = vsel %vm485, %v472, 0.0
      %v498 = vsel %vm486, %v473, 0.0
      %511 = vrot.lane.b32.xlu0 %v487, 112
      %v512 = vpop.permute.xlu0 %511
      %513 = vrot.lane.b32.xlu0 %v488, 112
      %v514 = vpop.permute.xlu0 %513
      %515 = vrot.lane.b32.xlu0 %v489, 112
      %v516 = vpop.permute.xlu0 %515
      %517 = vrot.lane.b32.xlu0 %v490, 112
      %v518 = vpop.permute.xlu0 %517
      %519 = vrot.lane.b32.xlu0 %v491, 112
      %v520 = vpop.permute.xlu0 %519
      %521 = vrot.lane.b32.xlu0 %v492, 112
      %v522 = vpop.permute.xlu0 %521
      %523 = vrot.lane.b32.xlu0 %v493, 112
      %v524 = vpop.permute.xlu0 %523
      %525 = vrot.lane.b32.xlu0 %v494, 112
      %v526 = vpop.permute.xlu0 %525
      %527 = vrot.lane.b32.xlu0 %v495, 112
      %v528 = vpop.permute.xlu0 %527
      %529 = vrot.lane.b32.xlu0 %v496, 112
      %v530 = vpop.permute.xlu0 %529
      %531 = vrot.lane.b32.xlu0 %v497, 112
      %v532 = vpop.permute.xlu0 %531
      %533 = vrot.lane.b32.xlu0 %v498, 112
      %v534 = vpop.permute.xlu0 %533
      %vm535 = vcmask 916480
      %v536 = vsel %vm535, %v512, %v514
      %v537 = vsel %vm535, %v514, %v516
      %v538 = vsel %vm535, %v518, %v520
      %v539 = vsel %vm535, %v520, %v522
      %v540 = vsel %vm535, %v524, %v526
      %v541 = vsel %vm535, %v526, %v528
      %v542 = vsel %vm535, %v530, %v532
      %v543 = vsel %vm535, %v532, %v534
      %552 = vrot.lane.b32.xlu0 %v487, 96
      %v553 = vpop.permute.xlu0 %552
      %554 = vrot.lane.b32.xlu0 %v488, 96
      %v555 = vpop.permute.xlu0 %554
      %556 = vrot.lane.b32.xlu0 %v489, 96
      %v557 = vpop.permute.xlu0 %556
      %558 = vrot.lane.b32.xlu0 %v490, 96
      %v559 = vpop.permute.xlu0 %558
      %560 = vrot.lane.b32.xlu0 %v491, 96
      %v561 = vpop.permute.xlu0 %560
      %562 = vrot.lane.b32.xlu0 %v492, 96
      %v563 = vpop.permute.xlu0 %562
      %564 = vrot.lane.b32.xlu0 %v493, 96
      %v565 = vpop.permute.xlu0 %564
      %566 = vrot.lane.b32.xlu0 %v494, 96
      %v567 = vpop.permute.xlu0 %566
      %568 = vrot.lane.b32.xlu0 %v495, 96
      %v569 = vpop.permute.xlu0 %568
      %570 = vrot.lane.b32.xlu0 %v496, 96
      %v571 = vpop.permute.xlu0 %570
      %572 = vrot.lane.b32.xlu0 %v497, 96
      %v573 = vpop.permute.xlu0 %572
      %574 = vrot.lane.b32.xlu0 %v498, 96
      %v575 = vpop.permute.xlu0 %574
      %vm576 = vcmask 785408
      %v577 = vsel %vm576, %v553, %v555
      %v578 = vsel %vm576, %v555, %v557
      %v579 = vsel %vm576, %v559, %v561
      %v580 = vsel %vm576, %v561, %v563
      %v581 = vsel %vm576, %v565, %v567
      %v582 = vsel %vm576, %v567, %v569
      %v583 = vsel %vm576, %v571, %v573
      %v584 = vsel %vm576, %v573, %v575
      %v593 = vpack.c.bf16 %v490, %v487
      %v594 = vpack.c.bf16 %v491, %v488
      %v595 = vpack.c.bf16 %v496, %v493
      %v596 = vpack.c.bf16 %v497, %v494
      %v597 = vpack.c.bf16 %v538, %v536
      %v598 = vpack.c.bf16 %v539, %v537
      %v599 = vpack.c.bf16 %v542, %v540
      %v600 = vpack.c.bf16 %v543, %v541
      %v601 = vpack.c.bf16 %v579, %v577
      %v602 = vpack.c.bf16 %v580, %v578
      %v603 = vpack.c.bf16 %v583, %v581
      %v604 = vpack.c.bf16 %v584, %v582
      %v605 = vld [vmem:[%s3] sm:$0xf]
      %v606 = vld [vmem:[%s3 + $0x4] sm:$0xf]
      %v607 = vld [vmem:[%s3 + $0x8] sm:$0xf]
      %v608 = vld [vmem:[%s3 + $0xc] sm:$0xf]
      %v609 = vld [vmem:[%s4] sm:$0xf]
      %v610 = vld [vmem:[%s4 + $0x4] sm:$0xf]
      %v611 = vld [vmem:[%s4 + $0x8] sm:$0xf]
      %v612 = vld [vmem:[%s4 + $0xc] sm:$0xf]
      %v613 = vld [vmem:[%s293] sm:$0xf]
      %v618 = vunpack.c.l.b16 %v609
      %v619 = vunpack.c.l.b16 %v610
      %v620 = vunpack.c.l.b16 %v611
      %v621 = vunpack.c.l.b16 %v612
      %v622 = vpack.c.b16 %v619, %v618
      %v623 = vpack.c.b16 %v621, %v620
      %v626 = vunpack.c.l.s4 1983009808
      %v627 = vunpack.c.0.s8 %v626
      %v628 = vlaneseq
      %v629 = vshrl.u32 %v628, 7
      %v630 = vsub.s32 %v627, %v629
      %v631 = vrot.slane %v613, %v630
      %v632 = vcombine.high %v631, %v631
      %vm633 = vcmask 31744
      %v635 = vsel %vm633, %v622, 0
      %v638 = vsel %vm633, %v623, 0
      %vm640 = vcmask 1041408
      %v642 = vsel %vm640, %v631, 0
      %v645 = vsel %vm640, %v632, 0
      %647 = vmatprep.subr.bf16.mxu0 %v645
      %648 = vmatpush1.bf16.msra.mxu0 %v642
      %649 = vmatprep.subr.bf16.mxu0 0
      %650 = vmatpush1.bf16.msra.mxu0 0
      %651 = vmatprep.subr.bf16.mxu0 0
      %652 = vmatpush1.bf16.msra.mxu0 0
      %653 = vmatprep.subr.bf16.mxu0 0
      %654 = vmatpush1.bf16.msra.mxu0 0
      %655 = vmatprep.subr.bf16.mxu0 0
      %656 = vmatpush1.bf16.msra.mxu0 0
      %657 = vmatprep.subr.bf16.mxu0 0
      %658 = vmatpush1.bf16.msra.mxu0 0
      %659 = vmatprep.subr.bf16.mxu0 0
      %660 = vmatpush1.bf16.msra.mxu0 0
      %661 = vmatprep.subr.bf16.mxu0 0
      %662 = vmatpush1.bf16.msra.mxu0 0
      %663 = vmatprep.subr.bf16.mxu0 0
      %664 = vmatpush1.bf16.msra.mxu0 0
      %665 = vmatprep.subr.bf16.mxu0 0
      %666 = vmatpush1.bf16.msra.mxu0 0
      %667 = vmatprep.subr.bf16.mxu0 0
      %668 = vmatpush1.bf16.msra.mxu0 0
      %669 = vmatprep.subr.bf16.mxu0 0
      %670 = vmatpush1.bf16.msra.mxu0 0
      %671 = vmatprep.subr.bf16.mxu0 0
      %672 = vmatpush1.bf16.msra.mxu0 0
      %673 = vmatprep.subr.bf16.mxu0 0
      %674 = vmatpush1.bf16.msra.mxu0 0
      %675 = vmatprep.subr.bf16.mxu0 0
      %676 = vmatpush1.bf16.msra.mxu0 0
      %677 = vmatprep.subr.bf16.mxu0 0
      %678 = vmatpush1.bf16.msra.mxu0 0
      %679 = vmatprep.mubr.bf16.mxu0 0
      %680 = vmatmul.mubr.bf16.gmra.mrb[0].mxu0 %v635
      %v681 = vpop.f32.mrb[0].mxu0
      %v682 = vadd.f32 0.0, %v681
      %v683 = vpop.f32.mrb[0].mxu0
      %v684 = vadd.f32 0.0, %v683
      %v685 = vpop.f32.mrb[0].mxu0
      %v686 = vadd.f32 0.0, %v685
      %v687 = vpop.f32.mrb[0].mxu0
      %v688 = vadd.f32 0.0, %v687
      %689 = vmatprep.mubr.bf16.mxu0 0
      %690 = vmatmul.mubr.bf16.gmra.mrb[0].mxu0 %v638
      %v691 = vpop.f32.mrb[0].mxu0
      %v692 = vadd.f32 0.0, %v691
      %v693 = vpop.f32.mrb[0].mxu0
      %v694 = vadd.f32 0.0, %v693
      %v695 = vpop.f32.mrb[0].mxu0
      %v696 = vadd.f32 0.0, %v695
      %v697 = vpop.f32.mrb[0].mxu0
      %v698 = vadd.f32 0.0, %v697
      %699 = vdwg.mxu0
      %v704 = vunpack.c.l.b16 %v605
      %v705 = vunpack.c.l.b16 %v606
      %v706 = vunpack.c.l.b16 %v607
      %v707 = vunpack.c.l.b16 %v608
      %v708 = vpack.c.b16 %v705, %v704
      %v709 = vpack.c.b16 %v707, %v706
      %v711 = vsel %vm576, %v708, 0
      %v714 = vsel %vm576, %v709, 0
      %716 = vmatprep.subr.bf16.mxu0 %v594
      %717 = vmatpush1.bf16.msra.mxu0 %v593
      %718 = vmatprep.subr.bf16.mxu0 %v596
      %719 = vmatpush1.bf16.msra.mxu0 %v595
      %720 = vmatprep.subr.bf16.mxu0 %v598
      %721 = vmatpush1.bf16.msra.mxu0 %v597
      %722 = vmatprep.subr.bf16.mxu0 %v600
      %723 = vmatpush1.bf16.msra.mxu0 %v599
      %724 = vmatprep.subr.bf16.mxu0 %v602
      %725 = vmatpush1.bf16.msra.mxu0 %v601
      %726 = vmatprep.subr.bf16.mxu0 %v604
      %727 = vmatpush1.bf16.msra.mxu0 %v603
      %728 = vmatprep.subr.bf16.mxu0 0
      %729 = vmatpush1.bf16.msra.mxu0 0
      %730 = vmatprep.subr.bf16.mxu0 0
      %731 = vmatpush1.bf16.msra.mxu0 0
      %732 = vmatprep.subr.bf16.mxu0 0
      %733 = vmatpush1.bf16.msra.mxu0 0
      %734 = vmatprep.subr.bf16.mxu0 0
      %735 = vmatpush1.bf16.msra.mxu0 0
      %736 = vmatprep.subr.bf16.mxu0 0
      %737 = vmatpush1.bf16.msra.mxu0 0
      %738 = vmatprep.subr.bf16.mxu0 0
      %739 = vmatpush1.bf16.msra.mxu0 0
      %740 = vmatprep.subr.bf16.mxu0 0
      %741 = vmatpush1.bf16.msra.mxu0 0
      %742 = vmatprep.subr.bf16.mxu0 0
      %743 = vmatpush1.bf16.msra.mxu0 0
      %744 = vmatprep.subr.bf16.mxu0 0
      %745 = vmatpush1.bf16.msra.mxu0 0
      %746 = vmatprep.subr.bf16.mxu0 0
      %747 = vmatpush1.bf16.msra.mxu0 0
      %748 = vmatprep.mubr.bf16.mxu0 0
      %749 = vmatmul.mubr.bf16.gmra.mrb[0].mxu0 %v711
      %v750 = vpop.f32.mrb[0].mxu0
      %v751 = vadd.f32 %v682, %v750
      %v752 = vpop.f32.mrb[0].mxu0
      %v753 = vadd.f32 %v684, %v752
      %v754 = vpop.f32.mrb[0].mxu0
      %v755 = vadd.f32 %v686, %v754
      %v756 = vpop.f32.mrb[0].mxu0
      %v757 = vadd.f32 %v688, %v756
      %758 = vmatprep.mubr.bf16.mxu0 0
      %759 = vmatmul.mubr.bf16.gmra.mrb[0].mxu0 %v714
      %v760 = vpop.f32.mrb[0].mxu0
      %v761 = vadd.f32 %v692, %v760
      %v762 = vpop.f32.mrb[0].mxu0
      %v763 = vadd.f32 %v694, %v762
      %v764 = vpop.f32.mrb[0].mxu0
      %v765 = vadd.f32 %v696, %v764
      %v766 = vpop.f32.mrb[0].mxu0
      %v767 = vadd.f32 %v698, %v766
      %768 = vdwg.mxu0
      %v769 = vld [vmem:[%s6] sm:$0xff]
      %v770 = vld [vmem:[%s6 + $0x8] sm:$0xff]
      %v771 = vld [vmem:[%s6 + $0x10] sm:$0xff]
      %v772 = vld [vmem:[%s6 + $0x18] sm:$0xff]
      %774 = vset.pattern.permute.xlu0 0
      %775 = vperm.xlu0 %774, %v769
      %v776 = vpop.permute.xlu0 %775
      %779 = vset.pattern.permute.xlu0 0
      %780 = vperm.xlu0 %779, %v770
      %v781 = vpop.permute.xlu0 %780
      %784 = vset.pattern.permute.xlu0 0
      %785 = vperm.xlu0 %784, %v771
      %v786 = vpop.permute.xlu0 %785
      %789 = vset.pattern.permute.xlu0 0
      %790 = vperm.xlu0 %789, %v772
      %v791 = vpop.permute.xlu0 %790
      %v793 = vadd.f32 %v751, %v776
      %v794 = vadd.f32 %v753, %v776
      %v795 = vadd.f32 %v755, %v781
      %v796 = vadd.f32 %v757, %v781
      %v797 = vadd.f32 %v761, %v786
      %v798 = vadd.f32 %v763, %v786
      %v799 = vadd.f32 %v765, %v791
      %v800 = vadd.f32 %v767, %v791
      %v801 = vmax.f32 %v793, 0.0
      %v802 = vmax.f32 %v794, 0.0
      %v803 = vmax.f32 %v795, 0.0
      %v804 = vmax.f32 %v796, 0.0
      %v805 = vmax.f32 %v797, 0.0
      %v806 = vmax.f32 %v798, 0.0
      %v807 = vmax.f32 %v799, 0.0
      %v808 = vmax.f32 %v800, 0.0
      %809 = vst [vmem:[%s298] sm:$0xff] %v801
      %810 = vst [vmem:[%s298 + $0x8] sm:$0xff] %v802
      %811 = vst [vmem:[%s298 + $0x10] sm:$0xff] %v803
      %812 = vst [vmem:[%s298 + $0x18] sm:$0xff] %v804
      %813 = vst [vmem:[%s298 + $0x20] sm:$0xff] %v805
      %814 = vst [vmem:[%s298 + $0x28] sm:$0xff] %v806
      %815 = vst [vmem:[%s298 + $0x30] sm:$0xff] %v807
      %816 = vst [vmem:[%s298 + $0x38] sm:$0xff] %v808
      %p817 = scmp.lt.s32.totalorder %s18, 1
      %s818 = scalar_select %p817, %s18, 1
      %s819 = smul.addr %s818, 8
      %s820 = smul.addr %s819, 8
      %s821 = scalar_lea.vmem %s7, %s820
      // Predicated region
      $region49: #{st_gcn_forward.1} parent=47 // pred_check
        %p822 = pneg %p193
      $region50: #{st_gcn_forward.1} parent=47 // pred_check_branch
        %824 = sbr.rel (%p822) target = $region52
      $region51: #{st_gcn_forward.1} parent=47 // pred_region
        _
      $region52: #{st_gcn_forward.1} parent=47 // pred_fallthru
        _
    $region48: #{st_gcn_forward.1} parent=5 // pred_fallthru
      _
    %p825 = scmp.le.s32.totalorder 2, %s13
    // Predicated region
    $region53: #{st_gcn_forward.1} parent=5 // pred_check
      %p826 = pneg %p825
    $region54: #{st_gcn_forward.1} parent=5 // pred_check_branch
      %828 = sbr.rel (%p826) target = $region56
    $region55: #{st_gcn_forward.1} parent=5 // pred_region
      %s829 = ssub.s32 %s13, 2
      // Predicated region
      $region57: #{st_gcn_forward.1} parent=55 // pred_check
        %p830 = pneg %p199
      $region58: #{st_gcn_forward.1} parent=55 // pred_check_branch
        %832 = sbr.rel (%p830) target = $region60
      $region59: #{st_gcn_forward.1} parent=55 // pred_region
        %p833 = scmp.lt.s32.totalorder %s19, 1
        %s834 = scalar_select %p833, %s19, 1
        %s835 = smul.addr %s834, 8
        %s836 = smul.addr %s835, 8
        %s837 = scalar_lea.vmem %s7, %s836
      $region60: #{st_gcn_forward.1} parent=55 // pred_fallthru
        _
    $region56: #{st_gcn_forward.1} parent=5 // pred_fallthru
      _
  $region6: #{st_gcn_forward.1} parent=0 // loop_footer
    %s17 = sadd.s32 1, %s13
  $region7: #{st_gcn_forward.1} parent=0 // loop_footer_branch
    %12 = sbr.rel target = $region3
  $region8: #{st_gcn_forward.1} parent=0 // loop_exit
    _

</llo_original>
